<compile_context>
chip_gen: v6e
topology: v6e:2x2x1
jax: 0.10.0
libtpu: 0.0.40
codegen_flags: <defaults>
</compile_context>

<pallas_src>
import functools

import jax
import jax.numpy as jnp
from jax.experimental import pallas as pl
from jax.experimental.pallas import tpu as pltpu

LB_SMOOTH = 0.01
IGNORE_INDEX = -100


def _ls_ce_kernel(logits_ref, label_ref, loss_part_ref, cnt_part_ref, *,
                  lb_smooth, ignore_index, n_rows):
    """Per-tile smoothed CE partial sums.

    logits_ref   : (TM, C)  native dtype (cast to f32 here only)
    label_ref    : (TM, 1)  int32
    loss_part_ref: (1, 8, 128) f32  -- this tile's sum of per-sample losses
    cnt_part_ref : (1, 8, 128) f32  -- this tile's count of valid samples
    """
    i = pl.program_id(0)

    x = logits_ref[...].astype(jnp.float32)            # (TM, C)
    lbl = label_ref[...]                                # (TM, 1) int32
    tm, c = x.shape

    # Mask rows past the true batch size (remainder tile reads padded garbage).
    row_ids = i * tm + jax.lax.broadcasted_iota(jnp.int32, (tm, 1), 0)
    in_bounds = row_ids < n_rows                        # (TM, 1)
    ignore = lbl == ignore_index                        # (TM, 1)
    valid = jnp.logical_and(in_bounds, jnp.logical_not(ignore))
    lbl_safe = jnp.where(ignore, 0, lbl)                # label[ignore] = 0

    # Numerically stable log-softmax pieces.
    m = jnp.max(x, axis=1, keepdims=True)               # (TM, 1)
    z = x - m                                           # (TM, C), z <= 0
    lse = jnp.log(jnp.sum(jnp.exp(z), axis=1, keepdims=True))   # (TM, 1)

    # Algebraic smoothed-CE (avoids materializing the full weights tensor and
    # the extra (TM,C) multiply):
    #   loss = -( lb_neg * (sum_z - C*lse) + (lb_pos - lb_neg) * (z_tgt - lse) )
    sum_z = jnp.sum(z, axis=1, keepdims=True)            # (TM, 1)
    cls_idx = jax.lax.broadcasted_iota(jnp.int32, (tm, c), 1)
    z_tgt = jnp.sum(jnp.where(cls_idx == lbl_safe, z, 0.0),
                    axis=1, keepdims=True)               # (TM, 1)

    lb_pos = jnp.float32(1.0 - lb_smooth)
    lb_neg = jnp.float32(lb_smooth / c)
    loss = -(lb_neg * (sum_z - jnp.float32(c) * lse)
             + (lb_pos - lb_neg) * (z_tgt - lse))        # (TM, 1)
    loss = jnp.where(valid, loss, 0.0)                   # zero ignored / OOB rows

    tile_loss = jnp.sum(loss)
    tile_cnt = jnp.sum(valid.astype(jnp.float32))

    # Broadcast each scalar over an aligned (8,128) slab -> unmasked stores.
    loss_part_ref[...] = jnp.full(loss_part_ref.shape, tile_loss, jnp.float32)
    cnt_part_ref[...] = jnp.full(cnt_part_ref.shape, tile_cnt, jnp.float32)


def label_smooth_cross_loss(logits, label, *, lb_smooth=LB_SMOOTH,
                            reduction="mean", ignore_index=IGNORE_INDEX,
                            tile_m=None):
    """Forward pass of LabelSmoothCrossLoss. logits: (N, C); label: (N,) int."""
    n, c = logits.shape
    label2d = label.astype(jnp.int32).reshape(n, 1)

    if tile_m is None:
        # ~4 MiB of logits per buffer (Pallas double-buffers -> ~8 MiB); fits
        # comfortably inside default scoped VMEM on v5e/v6e/v7x.
        itemsize = jnp.dtype(logits.dtype).itemsize
        row_bytes = max(c * itemsize, 1)
        tile_m = min(1024, (4 * 1024 * 1024) // row_bytes)
        tile_m = max(8, (tile_m // 8) * 8)
    # Never exceed the (sublane-rounded) batch size.
    tile_m = min(tile_m, max(8, ((n + 7) // 8) * 8))
    grid_m = pl.cdiv(n, tile_m)

    kernel = functools.partial(_ls_ce_kernel,
                               lb_smooth=float(lb_smooth),
                               ignore_index=int(ignore_index),
                               n_rows=n)

    loss_parts, cnt_parts = pl.pallas_call(
        kernel,
        out_shape=(jax.ShapeDtypeStruct((grid_m, 8, 128), jnp.float32),
                   jax.ShapeDtypeStruct((grid_m, 8, 128), jnp.float32)),
        grid_spec=pltpu.PrefetchScalarGridSpec(
            num_scalar_prefetch=0,
            grid=(grid_m,),
            in_specs=[
                pl.BlockSpec((tile_m, c), lambda i: (i, 0)),
                pl.BlockSpec((tile_m, 1), lambda i: (i, 0)),
            ],
            out_specs=[
                pl.BlockSpec((1, 8, 128), lambda i: (i, 0, 0)),
                pl.BlockSpec((1, 8, 128), lambda i: (i, 0, 0)),
            ],
        ),
        compiler_params=pltpu.CompilerParams(
            dimension_semantics=("parallel",),          # independent tiles
            vmem_limit_bytes=48 * 1024 * 1024),
    )(logits, label2d)   # native-dtype logits: no host-side f32 copy

    loss_sum = jnp.sum(loss_parts[:, 0, 0])
    n_valid = jnp.sum(cnt_parts[:, 0, 0])
    if reduction == "mean":
        # Parity with the torch module: divides by n_valid (NaN if everything
        # is ignore_index), no extra guard added.
        return loss_sum / n_valid
    if reduction == "sum":
        return loss_sum
    # TODO(synk): reduction='none' would need the per-sample (N,) loss output.
    raise NotImplementedError("only 'mean' and 'sum' reductions are implemented")


def _reference(logits, label, *, lb_smooth=LB_SMOOTH, reduction="mean",
               ignore_index=IGNORE_INDEX):
    logits = logits.astype(jnp.float32)
    n, c = logits.shape
    ignore = label == ignore_index
    n_valid = jnp.sum(~ignore)
    lbl = jnp.where(ignore, 0, label)
    lb_pos, lb_neg = 1.0 - lb_smooth, lb_smooth / c
    one_hot = jnp.where(jax.nn.one_hot(lbl, c, dtype=jnp.bool_), lb_pos, lb_neg)
    logp = jax.nn.log_softmax(logits, axis=1)
    loss = -jnp.sum(logp * one_hot, axis=1)
    loss = jnp.where(ignore, 0.0, loss)
    if reduction == "mean":
        return jnp.sum(loss) / n_valid
    return jnp.sum(loss)


if __name__ == "__main__":
    key = jax.random.PRNGKey(0)
    k1, k2 = jax.random.split(key)

    N, C = 16, 32                      # small synthetic shapes
    logits = (jax.random.normal(k1, (N, C), dtype=jnp.float32) * 2.0
              ).astype(jnp.bfloat16)   # native bf16 streamed into the kernel
    label = jax.random.randint(k2, (N,), 0, C, dtype=jnp.int32)
    # include some ignored labels to exercise the masking path
    label = label.at[3].set(IGNORE_INDEX).at[10].set(IGNORE_INDEX)

    out = label_smooth_cross_loss(logits, label, reduction="mean")
    out = jax.block_until_ready(out)

    ref = _reference(logits, label, reduction="mean")
    assert jnp.allclose(out, ref, rtol=1e-5, atol=1e-5), (out, ref)

    out_sum = jax.block_until_ready(
        label_smooth_cross_loss(logits, label, reduction="sum"))
    ref_sum = _reference(logits, label, reduction="sum")
    assert jnp.allclose(out_sum, ref_sum, rtol=1e-5, atol=1e-5), (out_sum, ref_sum)

    print("KERNEL_OK")
</pallas_src>

<mosaic_0001>
module attributes {stable_mosaic.version = 11 : i64} {
  func.func @_ls_ce_kernel(%arg0: i32, %arg1: memref<16x32xbf16, #tpu.memory_space<vmem>>, %arg2: memref<16x1xi32, #tpu.memory_space<vmem>>, %arg3: memref<1x8x128xf32, #tpu.memory_space<vmem>>, %arg4: memref<1x8x128xf32, #tpu.memory_space<vmem>>) attributes {dimension_semantics = [#tpu.dimension_semantics<parallel>], iteration_bounds = array<i64: 1>, scalar_prefetch = 0 : i64, scratch_operands = 0 : i64, tpu.core_type = #tpu.core_type<tc>, window_params = [{transform_indices = @transform_0, window_bounds = array<i64: 16, 32>}, {transform_indices = @transform_1, window_bounds = array<i64: 16, 1>}, {transform_indices = @transform_2, window_bounds = array<i64: 1, 8, 128>}, {transform_indices = @transform_3, window_bounds = array<i64: 1, 8, 128>}]} {
    %c0 = arith.constant 0 : index
    %c0_0 = arith.constant 0 : index
    %0 = vector.load %arg1[%c0, %c0_0] : memref<16x32xbf16, #tpu.memory_space<vmem>>, vector<16x32xbf16>
    %1 = arith.extf %0 : vector<16x32xbf16> to vector<16x32xf32>
    %c0_1 = arith.constant 0 : index
    %c0_2 = arith.constant 0 : index
    %2 = vector.load %arg2[%c0_1, %c0_2] : memref<16x1xi32, #tpu.memory_space<vmem>>, vector<16x1xi32>
    %c16_i32 = arith.constant 16 : i32
    %3 = arith.muli %arg0, %c16_i32 : i32
    %4 = tpu.iota {dimensions = array<i32: 0>} : vector<16x1xi32>
    %5 = vector.broadcast %3 : i32 to vector<16x1xi32>
    %6 = arith.addi %5, %4 : vector<16x1xi32>
    %c16_i32_3 = arith.constant 16 : i32
    %7 = vector.broadcast %c16_i32_3 : i32 to vector<16x1xi32>
    %8 = arith.cmpi slt, %6, %7 : vector<16x1xi32>
    %c-100_i32 = arith.constant -100 : i32
    %9 = vector.broadcast %c-100_i32 : i32 to vector<16x1xi32>
    %10 = arith.cmpi eq, %2, %9 : vector<16x1xi32>
    %cst = arith.constant dense<true> : vector<16x1xi1>
    %11 = arith.xori %10, %cst : vector<16x1xi1>
    %12 = arith.andi %8, %11 : vector<16x1xi1>
    %c0_i32 = arith.constant 0 : i32
    %13 = vector.broadcast %c0_i32 : i32 to vector<16x1xi32>
    %14 = arith.select %10, %13, %2 : vector<16x1xi1>, vector<16x1xi32>
    %cst_4 = arith.constant dense<0xFF800000> : vector<16xf32>
    %15 = vector.multi_reduction <maximumf>, %1, %cst_4 [1] : vector<16x32xf32> to vector<16xf32>
    %16 = vector.shape_cast %15 : vector<16xf32> to vector<16x1xf32>
    %17 = vector.broadcast %16 : vector<16x1xf32> to vector<16x32xf32>
    %18 = arith.subf %1, %17 : vector<16x32xf32>
    %19 = math.exp %18 : vector<16x32xf32>
    %cst_5 = arith.constant dense<0.000000e+00> : vector<16xf32>
    %20 = vector.multi_reduction <add>, %19, %cst_5 [1] : vector<16x32xf32> to vector<16xf32>
    %21 = vector.shape_cast %20 : vector<16xf32> to vector<16x1xf32>
    %22 = math.log %21 : vector<16x1xf32>
    %cst_6 = arith.constant dense<0.000000e+00> : vector<16xf32>
    %23 = vector.multi_reduction <add>, %18, %cst_6 [1] : vector<16x32xf32> to vector<16xf32>
    %24 = vector.shape_cast %23 : vector<16xf32> to vector<16x1xf32>
    %25 = tpu.iota {dimensions = array<i32: 1>} : vector<16x32xi32>
    %26 = vector.broadcast %14 : vector<16x1xi32> to vector<16x32xi32>
    %27 = arith.cmpi eq, %25, %26 : vector<16x32xi32>
    %cst_7 = arith.constant 0.000000e+00 : f32
    %28 = vector.broadcast %cst_7 : f32 to vector<16x32xf32>
    %29 = arith.select %27, %18, %28 : vector<16x32xi1>, vector<16x32xf32>
    %cst_8 = arith.constant dense<0.000000e+00> : vector<16xf32>
    %30 = vector.multi_reduction <add>, %29, %cst_8 [1] : vector<16x32xf32> to vector<16xf32>
    %31 = vector.shape_cast %30 : vector<16xf32> to vector<16x1xf32>
    %cst_9 = arith.constant 3.200000e+01 : f32
    %32 = vector.broadcast %cst_9 : f32 to vector<16x1xf32>
    %33 = arith.mulf %32, %22 : vector<16x1xf32>
    %34 = arith.subf %24, %33 : vector<16x1xf32>
    %cst_10 = arith.constant 3.125000e-04 : f32
    %35 = vector.broadcast %cst_10 : f32 to vector<16x1xf32>
    %36 = arith.mulf %35, %34 : vector<16x1xf32>
    %cst_11 = arith.constant 9.900000e-01 : f32
    %cst_12 = arith.constant 3.125000e-04 : f32
    %37 = arith.subf %cst_11, %cst_12 : f32
    %38 = arith.subf %31, %22 : vector<16x1xf32>
    %39 = vector.broadcast %37 : f32 to vector<16x1xf32>
    %40 = arith.mulf %39, %38 : vector<16x1xf32>
    %41 = arith.addf %36, %40 : vector<16x1xf32>
    %cst_13 = arith.constant 0.000000e+00 : f32
    %42 = vector.broadcast %cst_13 : f32 to vector<16x1xf32>
    %43 = arith.subf %42, %41 : vector<16x1xf32>
    %cst_14 = arith.constant 0.000000e+00 : f32
    %44 = vector.broadcast %cst_14 : f32 to vector<16x1xf32>
    %45 = arith.select %12, %43, %44 : vector<16x1xi1>, vector<16x1xf32>
    %46 = vector.shape_cast %45 : vector<16x1xf32> to vector<1x16x1xf32>
    %cst_15 = arith.constant dense<0.000000e+00> : vector<1xf32>
    %47 = vector.multi_reduction <add>, %46, %cst_15 [1, 2] : vector<1x16x1xf32> to vector<1xf32>
    %48 = vector.shape_cast %47 : vector<1xf32> to vector<1x1x1xf32>
    %49 = vector.extract %48[0, 0, 0] : f32 from vector<1x1x1xf32>
    %50 = arith.extui %12 : vector<16x1xi1> to vector<16x1xi32>
    %51 = arith.sitofp %50 : vector<16x1xi32> to vector<16x1xf32>
    %52 = vector.shape_cast %51 : vector<16x1xf32> to vector<1x16x1xf32>
    %cst_16 = arith.constant dense<0.000000e+00> : vector<1xf32>
    %53 = vector.multi_reduction <add>, %52, %cst_16 [1, 2] : vector<1x16x1xf32> to vector<1xf32>
    %54 = vector.shape_cast %53 : vector<1xf32> to vector<1x1x1xf32>
    %55 = vector.extract %54[0, 0, 0] : f32 from vector<1x1x1xf32>
    %56 = vector.broadcast %49 : f32 to vector<1x8x128xf32>
    %c0_17 = arith.constant 0 : index
    %c0_18 = arith.constant 0 : index
    %c0_19 = arith.constant 0 : index
    %57 = vector.load %arg3[%c0_17, %c0_18, %c0_19] : memref<1x8x128xf32, #tpu.memory_space<vmem>>, vector<1x8x128xf32>
    tpu.vector_store %arg3[%c0_17, %c0_18, %c0_19], %56 {strides = array<i32>} : memref<1x8x128xf32, #tpu.memory_space<vmem>>, vector<1x8x128xf32>,
    %58 = vector.broadcast %55 : f32 to vector<1x8x128xf32>
    %c0_20 = arith.constant 0 : index
    %c0_21 = arith.constant 0 : index
    %c0_22 = arith.constant 0 : index
    %59 = vector.load %arg4[%c0_20, %c0_21, %c0_22] : memref<1x8x128xf32, #tpu.memory_space<vmem>>, vector<1x8x128xf32>
    tpu.vector_store %arg4[%c0_20, %c0_21, %c0_22], %58 {strides = array<i32>} : memref<1x8x128xf32, #tpu.memory_space<vmem>>, vector<1x8x128xf32>,
    return
  }
  func.func @transform_0(%arg0: i32) -> (i32, i32) {
    %c0_i32 = arith.constant 0 : i32
    %c0_i32_0 = arith.constant 0 : i32
    return %arg0, %c0_i32 : i32, i32
  }
  func.func @transform_1(%arg0: i32) -> (i32, i32) {
    %c0_i32 = arith.constant 0 : i32
    %c0_i32_0 = arith.constant 0 : i32
    return %arg0, %c0_i32 : i32, i32
  }
  func.func @transform_2(%arg0: i32) -> (i32, i32, i32) {
    %c0_i32 = arith.constant 0 : i32
    %c0_i32_0 = arith.constant 0 : i32
    %c0_i32_1 = arith.constant 0 : i32
    return %arg0, %c0_i32, %c0_i32_0 : i32, i32, i32
  }
  func.func @transform_3(%arg0: i32) -> (i32, i32, i32) {
    %c0_i32 = arith.constant 0 : i32
    %c0_i32_0 = arith.constant 0 : i32
    %c0_i32_1 = arith.constant 0 : i32
    return %arg0, %c0_i32, %c0_i32_0 : i32, i32, i32
  }
}

</mosaic_0001>

<llo_original>
// kernel: tpu_custom_call.1
$region0: #{tpu_custom_call.1}
  #allocation0 [shape = 'u32[]', space=smem, size = 0x4, offset = 0x4, fixed_abs, tag = 'smem constant byte address 0x4 - core index']
  #allocation1 [shape = 'u32[144,128]{1,0:T(1,128)}', space=vmem, size = 0x12000, scoped, tag = 'internal scratch']
  %s0 = inlined_call_operand.vmem [shape: bf16[16,32], index: 0, kind: input, shape index: {}]
  %s1 = inlined_call_operand.vmem [shape: s32[16,1], index: 1, kind: input, shape index: {}]
  %s2 = inlined_call_operand.hbm [shape: f32[1,8,128], index: 2, kind: output, shape index: {0}]
  %s3 = inlined_call_operand.hbm [shape: f32[1,8,128], index: 3, kind: output, shape index: {1}]
  %4 = xla_tuple %s2, %s3
  %s5 = sld [smem:[#allocation0]]
  $region26: #{tpu_custom_call.1} parent=0
    _
  %s7 = ssub.s32 1, %s5
  %s8 = scalar_select 0, %s7, %s5
  $region1: #{tpu_custom_call.1} parent=0
    #allocation2 [shape = 'u8[4096]{0}', space=vmem, size = 0x1000, scoped, tag = 'output window, operand 0, single buffered']
    #allocation3 [shape = 's32[1]{0}', space=sflag, size = 0x4, scoped, tag = 'scoped memory for tpu_custom_call.1']
    #allocation4 [shape = 'u8[4096]{0}', space=vmem, size = 0x1000, scoped, tag = 'output window, operand 1, single buffered']
    #allocation5 [shape = 's32[1]{0}', space=sflag, size = 0x4, scoped, tag = 'scoped memory for tpu_custom_call.1']
    %9 = vsyncpa [#allocation3], 0
    %10 = vsyncpa [#allocation5], 0
    // Predicated region
    $region2: #{tpu_custom_call.1} parent=1 // pred_check
      _
    $region3: #{tpu_custom_call.1} parent=1 // pred_check_branch
      %12 = sbr.rel (0) target = $region5
    $region4: #{tpu_custom_call.1} parent=1 // pred_region
      _
    $region5: #{tpu_custom_call.1} parent=1 // pred_fallthru
      _
    // Predicated region
    $region6: #{tpu_custom_call.1} parent=1 // pred_check
      _
    $region7: #{tpu_custom_call.1} parent=1 // pred_check_branch
      %14 = sbr.rel (0) target = $region9
    $region8: #{tpu_custom_call.1} parent=1 // pred_region
      _
    $region9: #{tpu_custom_call.1} parent=1 // pred_fallthru
      _
    %v15 = vld [vmem:[%s0] sm:$0xf]
    %v16 = vld [vmem:[%s0 + $0x4] sm:$0xf]
    %v17 = vunpack.c.l.bf16 %v15
    %v18 = vunpack.c.l.bf16 %v16
    %v19 = vld [vmem:[%s1] sm:$0xff]
    %v20 = vld [vmem:[%s1 + $0x8] sm:$0xff]
    %s21 = smul.u32 0, 16
    %v22 = vlaneseq
    %v23 = vshrl.u32 %v22, 7
    %v24 = vadd.s32 %v23, 8
    %v25 = vstv %s21
    %v26 = vadd.s32 %v25, %v23
    %v27 = vadd.s32 %v25, %v24
    %vm28 = vcmp.lt.s32.totalorder %v26, 16
    %vm29 = vcmp.lt.s32.totalorder %v27, 16
    %vm30 = vcmp.eq.s32.totalorder %v19, 4294967196
    %vm31 = vcmp.eq.s32.totalorder %v20, 4294967196
    %vm32 = vmxor %vm30, 1
    %vm33 = vmxor %vm31, 1
    %vm34 = vmand %vm28, %vm32
    %vm35 = vmand %vm29, %vm33
    %v36 = vsel %vm30, 0, %v19
    %v37 = vsel %vm31, 0, %v20
    %vm38 = vcmask 261120
    %v39 = vsel %vm38, %v17, -inf
    %40 = vmax.xlane.f32.xlu0 %v39
    %v41 = vpop.xlane.xlu0 %40
    %v42 = vsel %vm38, %v18, -inf
    %43 = vmax.xlane.f32.xlu0 %v42
    %v44 = vpop.xlane.xlu0 %43
    %v45 = vsub.f32 %v17, %v41
    %v46 = vsub.f32 %v18, %v44
    %v47 = vmul.f32 %v45, 1.442695
    %v48 = vpow.pop %v47
    %v49 = vmul.f32 %v46, 1.442695
    %v50 = vpow.pop %v49
    %v51 = vsel %vm38, %v48, 0.0
    %52 = vadd.xlane.f32.xlu0 %v51
    %v53 = vpop.xlane.xlu0 %52
    %v54 = vsel %vm38, %v50, 0.0
    %55 = vadd.xlane.f32.xlu0 %v54
    %v56 = vpop.xlane.xlu0 %55
    %v57 = vlog2.pop %v53
    %v58 = vmul.f32 %v57, 0.6931472
    %v59 = vlog2.pop %v56
    %v60 = vmul.f32 %v59, 0.6931472
    %v61 = vsel %vm38, %v45, 0.0
    %62 = vadd.xlane.f32.xlu0 %v61
    %v63 = vpop.xlane.xlu0 %62
    %v64 = vsel %vm38, %v46, 0.0
    %65 = vadd.xlane.f32.xlu0 %v64
    %v66 = vpop.xlane.xlu0 %65
    %v67 = vlaneseq
    %v68 = vand.u32 %v67, 127
    %69 = vset.pattern.permute.xlu0 0
    %70 = vperm.xlu0 %69, %v36
    %v71 = vpop.permute.xlu0 %70
    %72 = vset.pattern.permute.xlu0 0
    %73 = vperm.xlu0 %72, %v37
    %v74 = vpop.permute.xlu0 %73
    %vm75 = vcmp.eq.s32.totalorder %v68, %v71
    %vm76 = vcmp.eq.s32.totalorder %v68, %v74
    %v77 = vsel %vm75, %v45, 0.0
    %v78 = vsel %vm76, %v46, 0.0
    %v79 = vsel %vm38, %v77, 0.0
    %80 = vadd.xlane.f32.xlu0 %v79
    %v81 = vpop.xlane.xlu0 %80
    %v82 = vsel %vm38, %v78, 0.0
    %83 = vadd.xlane.f32.xlu0 %v82
    %v84 = vpop.xlane.xlu0 %83
    %v85 = vmul.f32 %v58, 32.0
    %v86 = vmul.f32 %v60, 32.0
    %v87 = vsub.f32 %v63, %v85
    %v88 = vsub.f32 %v66, %v86
    %v89 = vmul.f32 %v87, 0.0003125
    %v90 = vmul.f32 %v88, 0.0003125
    %v91 = vsub.f32 %v81, %v58
    %v92 = vsub.f32 %v84, %v60
    %v93 = vmul.f32 %v91, 0.9896875
    %v94 = vmul.f32 %v92, 0.9896875
    %v95 = vadd.f32 %v89, %v93
    %v96 = vadd.f32 %v90, %v94
    %v97 = vsub.f32 0.0, %v95
    %v98 = vsub.f32 0.0, %v96
    %v99 = vsel %vm34, %v97, 0.0
    %v100 = vsel %vm35, %v98, 0.0
    %vm101 = vcmask 7168
    %v102 = vsel %vm101, %v99, 0.0
    %v103 = vsel %vm101, %v100, 0.0
    %v104 = vadd.f32 %v102, %v103
    %105 = vadd.xlane.f32.xlu0 %v104
    %v106 = vpop.xlane.xlu0 %105
    %v107 = vrot.slane %v106, 4
    %v108 = vadd.f32 %v106, %v107
    %v109 = vrot.slane %v108, 2
    %v110 = vadd.f32 %v108, %v109
    %v111 = vrot.slane %v110, 1
    %v112 = vadd.f32 %v110, %v111
    %s113 = vtos %v112
    %v114 = vsel %vm34, 1, 0
    %v115 = vsel %vm35, 1, 0
    %v116 = vcvt.s32.f32 %v114
    %v117 = vcvt.s32.f32 %v115
    %v118 = vsel %vm101, %v116, 0.0
    %v119 = vsel %vm101, %v117, 0.0
    %v120 = vadd.f32 %v118, %v119
    %121 = vadd.xlane.f32.xlu0 %v120
    %v122 = vpop.xlane.xlu0 %121
    %v123 = vrot.slane %v122, 4
    %v124 = vadd.f32 %v122, %v123
    %v125 = vrot.slane %v124, 2
    %v126 = vadd.f32 %v124, %v125
    %v127 = vrot.slane %v126, 1
    %v128 = vadd.f32 %v126, %v127
    %s129 = vtos %v128
    %v130 = vstv %s113
    %131 = vst [vmem:[#allocation2] sm:$0xff] %v130
    %v132 = vstv %s129
    %133 = vst [vmem:[#allocation4] sm:$0xff] %v132
    // Predicated region
    $region10: #{tpu_custom_call.1} parent=1 // pred_check
      _
    $region11: #{tpu_custom_call.1} parent=1 // pred_check_branch
      %135 = sbr.rel (0) target = $region13
    $region12: #{tpu_custom_call.1} parent=1 // pred_region
      %s137 = ssub.s32 128, 128
      %138 = vsyncadd [#allocation3], %s137
      %s140 = sshll.u32 [#allocation2], 4
      %s141 = int_to_ptr.vmem [resolvable:$true] %s140
      %143 = dma.vmem_to_hbm [thread:$0]  %s141, 128, %s2, [#allocation3]
    $region13: #{tpu_custom_call.1} parent=1 // pred_fallthru
      _
    // Predicated region
    $region14: #{tpu_custom_call.1} parent=1 // pred_check
      _
    $region15: #{tpu_custom_call.1} parent=1 // pred_check_branch
      %145 = sbr.rel (0) target = $region17
    $region16: #{tpu_custom_call.1} parent=1 // pred_region
      %s147 = ssub.s32 128, 128
      %148 = vsyncadd [#allocation5], %s147
      %s150 = sshll.u32 [#allocation4], 4
      %s151 = int_to_ptr.vmem [resolvable:$true] %s150
      %153 = dma.vmem_to_hbm [thread:$0]  %s151, 128, %s3, [#allocation5]
    $region17: #{tpu_custom_call.1} parent=1 // pred_fallthru
      _
    // Predicated region
    $region18: #{tpu_custom_call.1} parent=1 // pred_check
      _
    $region19: #{tpu_custom_call.1} parent=1 // pred_check_branch
      %155 = sbr.rel (0) target = $region21
    $region20: #{tpu_custom_call.1} parent=1 // pred_region
      %156 = dma.done [#allocation3], 128
    $region21: #{tpu_custom_call.1} parent=1 // pred_fallthru
      _
    // Predicated region
    $region22: #{tpu_custom_call.1} parent=1 // pred_check
      _
    $region23: #{tpu_custom_call.1} parent=1 // pred_check_branch
      %158 = sbr.rel (0) target = $region25
    $region24: #{tpu_custom_call.1} parent=1 // pred_region
      %159 = dma.done [#allocation5], 128
    $region25: #{tpu_custom_call.1} parent=1 // pred_fallthru
      _
    %160 = vsyncpa [#allocation3], 1
    %161 = vsyncpa [#allocation5], 1

</llo_original>
